<compile_context>
chip_gen: v7x
topology: tpu7x:2x2x1
jax: 0.10.0
libtpu: 0.0.40
codegen_flags: <defaults>
</compile_context>

<pallas_src>
import jax
import jax.numpy as jnp
from jax.experimental import pallas as pl
from jax.experimental.pallas import tpu as pltpu


def gcn_seq_kernel(alpha_ref, a_ref, x_ref, w1_ref, w23_ref, out_ref):
    A = a_ref[0]            # (N, N)   bf16
    X = x_ref[0]            # (N, Din) bf16
    W1 = w1_ref[...]        # (Din, H) bf16
    W23 = w23_ref[...]      # (H, P)   bf16  (= [W2 | W3 | zero-pad])

    # F = A @ X                       (dropout == identity in eval mode)
    AX = jnp.dot(A, X, preferred_element_type=jnp.float32)

    # gcn_layer1: PReLU(F @ W1)
    Hpre = jnp.dot(AX.astype(jnp.bfloat16), W1, preferred_element_type=jnp.float32)
    alpha = alpha_ref[0]
    Fh = jnp.where(Hpre > 0.0, Hpre, alpha * Hpre)

    # F1 = F2 = A @ Fh ; [output1 | output2] = (A @ Fh) @ [W2 | W3]  (fused, lane-dense)
    AF = jnp.dot(A, Fh.astype(jnp.bfloat16), preferred_element_type=jnp.float32)
    out_ref[0] = jnp.dot(AF.astype(jnp.bfloat16), W23, preferred_element_type=jnp.float32)


def gcn_for_sequence(A, X, W1, alpha, W2, W3):
    B, N, _ = A.shape
    Din = X.shape[-1]
    Hd = W1.shape[-1]
    Dout = W2.shape[-1]

    # Fuse the two tail weights and zero-pad the fused output dim to a multiple
    # of 128 lanes so the output store is unmasked / lane-dense.
    P = max(128, ((2 * Dout + 127) // 128) * 128)
    W23 = jnp.concatenate([W2, W3], axis=1)
    if P > 2 * Dout:
        W23 = jnp.pad(W23, ((0, 0), (0, P - 2 * Dout)))

    # bf16 MXU operands, f32 accumulation inside the kernel.
    A_b = A.astype(jnp.bfloat16)
    X_b = X.astype(jnp.bfloat16)
    W1_b = W1.astype(jnp.bfloat16)
    W23_b = W23.astype(jnp.bfloat16)

    flops = B * (2 * N * N * Din + 2 * N * Din * Hd + 2 * N * N * Hd + 2 * N * Hd * P)
    bytes_accessed = (B * (2 * N * N + 2 * N * Din + 4 * N * P)
                      + 2 * (Din * Hd + Hd * P) + 4)

    out_pad = pl.pallas_call(
        gcn_seq_kernel,
        out_shape=jax.ShapeDtypeStruct((B, N, P), jnp.float32),
        grid=(B,),
        in_specs=[
            pl.BlockSpec(memory_space=pltpu.MemorySpace.SMEM),          # alpha
            pl.BlockSpec((1, N, N), lambda b: (b, 0, 0)),               # A
            pl.BlockSpec((1, N, Din), lambda b: (b, 0, 0)),             # X
            pl.BlockSpec((Din, Hd), lambda b: (0, 0)),                  # W1 (resident)
            pl.BlockSpec((Hd, P), lambda b: (0, 0)),                    # W23 (resident)
        ],
        out_specs=pl.BlockSpec((1, N, P), lambda b: (b, 0, 0)),
        compiler_params=pltpu.CompilerParams(
            dimension_semantics=("parallel",),
            vmem_limit_bytes=32 * 1024 * 1024,
        ),
        cost_estimate=pl.CostEstimate(
            flops=flops, transcendentals=0, bytes_accessed=bytes_accessed),
    )(alpha, A_b, X_b, W1_b, W23_b)

    return out_pad[..., :Dout], out_pad[..., Dout:2 * Dout]


def reference(A, X, W1, alpha, W2, W3):
    # Mirrors the kernel's bf16-operand / f32-accumulate numerics.
    Ab = A.astype(jnp.bfloat16)
    Xb = X.astype(jnp.bfloat16)
    W1b = W1.astype(jnp.bfloat16)
    W2b = W2.astype(jnp.bfloat16)
    W3b = W3.astype(jnp.bfloat16)

    AX = jnp.einsum("bij,bjd->bid", Ab, Xb, preferred_element_type=jnp.float32)
    Hpre = jnp.einsum("bnd,dh->bnh", AX.astype(jnp.bfloat16), W1b,
                      preferred_element_type=jnp.float32)
    Fh = jnp.where(Hpre > 0.0, Hpre, alpha[0] * Hpre)
    AF = jnp.einsum("bij,bjh->bih", Ab, Fh.astype(jnp.bfloat16),
                    preferred_element_type=jnp.float32)
    o1 = jnp.einsum("bnh,hd->bnd", AF.astype(jnp.bfloat16), W2b,
                    preferred_element_type=jnp.float32)
    o2 = jnp.einsum("bnh,hd->bnd", AF.astype(jnp.bfloat16), W3b,
                    preferred_element_type=jnp.float32)
    return o1, o2


if __name__ == "__main__":
    # Small shapes consistent with the module's forward:
    # B graphs per call, N nodes, input_dim, hidden_dim, out_dim
    B, N, input_dim, hidden_dim, out_dim = 4, 8, 16, 32, 8

    key = jax.random.PRNGKey(0)
    k_a, k_x, k_w1, k_w2, k_w3 = jax.random.split(key, 5)

    A = jax.random.uniform(k_a, (B, N, N), dtype=jnp.float32)
    X = jax.random.normal(k_x, (B, N, input_dim), dtype=jnp.float32)

    # Deterministic parameter init (nn.Linear-style uniform bound), stored pre-transposed.
    def linear_weight(k, fan_in, fan_out):
        bound = 1.0 / jnp.sqrt(jnp.float32(fan_in))
        # PyTorch stores (out, in); we keep (in, out) so the kernel does x @ W.
        return jax.random.uniform(k, (fan_in, fan_out), dtype=jnp.float32,
                                  minval=-bound, maxval=bound)

    W1 = linear_weight(k_w1, input_dim, hidden_dim)
    W2 = linear_weight(k_w2, hidden_dim, out_dim)
    W3 = linear_weight(k_w3, hidden_dim, out_dim)
    alpha = jnp.array([0.25], dtype=jnp.float32)  # nn.PReLU default

    out1, out2 = gcn_for_sequence(A, X, W1, alpha, W2, W3)
    jax.block_until_ready((out1, out2))

    ref1, ref2 = reference(A, X, W1, alpha, W2, W3)
    assert out1.shape == (B, N, out_dim) and out2.shape == (B, N, out_dim)
    assert jnp.allclose(out1, ref1, atol=1e-2, rtol=1e-2)
    assert jnp.allclose(out2, ref2, atol=1e-2, rtol=1e-2)

    print("KERNEL_OK")
</pallas_src>

<mosaic_0001>
module attributes {stable_mosaic.version = 11 : i64} {
  func.func @gcn_seq_kernel(%arg0: i32, %arg1: memref<1xf32, #tpu.memory_space<smem>>, %arg2: memref<1x8x8xbf16, #tpu.memory_space<vmem>>, %arg3: memref<1x8x16xbf16, #tpu.memory_space<vmem>>, %arg4: memref<16x32xbf16, #tpu.memory_space<vmem>>, %arg5: memref<32x128xbf16, #tpu.memory_space<vmem>>, %arg6: memref<1x8x128xf32, #tpu.memory_space<vmem>>) attributes {dimension_semantics = [#tpu.dimension_semantics<parallel>], iteration_bounds = array<i64: 4>, scalar_prefetch = 0 : i64, scratch_operands = 0 : i64, tpu.core_type = #tpu.core_type<tc>, window_params = [{transform_indices = @transform_0, window_bounds = array<i64: 1>}, {transform_indices = @transform_1, window_bounds = array<i64: 1, 8, 8>}, {transform_indices = @transform_2, window_bounds = array<i64: 1, 8, 16>}, {pipeline_mode = #tpu.pipeline_mode<synchronous>, transform_indices = @transform_3, window_bounds = array<i64: 16, 32>}, {pipeline_mode = #tpu.pipeline_mode<synchronous>, transform_indices = @transform_4, window_bounds = array<i64: 32, 128>}, {transform_indices = @transform_5, window_bounds = array<i64: 1, 8, 128>}]} {
    %c0 = arith.constant 0 : index
    %c0_0 = arith.constant 0 : index
    %c0_1 = arith.constant 0 : index
    %0 = vector.load %arg2[%c0, %c0_0, %c0_1] : memref<1x8x8xbf16, #tpu.memory_space<vmem>>, vector<1x8x8xbf16>
    %1 = vector.shape_cast %0 : vector<1x8x8xbf16> to vector<8x8xbf16>
    %c0_2 = arith.constant 0 : index
    %c0_3 = arith.constant 0 : index
    %c0_4 = arith.constant 0 : index
    %2 = vector.load %arg3[%c0_2, %c0_3, %c0_4] : memref<1x8x16xbf16, #tpu.memory_space<vmem>>, vector<1x8x16xbf16>
    %3 = vector.shape_cast %2 : vector<1x8x16xbf16> to vector<8x16xbf16>
    %c0_5 = arith.constant 0 : index
    %c0_6 = arith.constant 0 : index
    %4 = vector.load %arg4[%c0_5, %c0_6] : memref<16x32xbf16, #tpu.memory_space<vmem>>, vector<16x32xbf16>
    %c0_7 = arith.constant 0 : index
    %c0_8 = arith.constant 0 : index
    %5 = vector.load %arg5[%c0_7, %c0_8] : memref<32x128xbf16, #tpu.memory_space<vmem>>, vector<32x128xbf16>
    %cst = arith.constant dense<0.000000e+00> : vector<8x16xf32>
    %6 = tpu.matmul %1, %3, %cst {dimension_numbers = #tpu.dot_dimension_numbers<[1], [0], [0], [1], [0, 0, 1, 1], [], []>} : vector<8x8xbf16>, vector<8x16xbf16>, vector<8x16xf32> -> vector<8x16xf32>
    %7 = arith.truncf %6 : vector<8x16xf32> to vector<8x16xbf16>
    %cst_9 = arith.constant dense<0.000000e+00> : vector<8x32xf32>
    %8 = tpu.matmul %7, %4, %cst_9 {dimension_numbers = #tpu.dot_dimension_numbers<[1], [0], [0], [1], [0, 0, 1, 1], [], []>} : vector<8x16xbf16>, vector<16x32xbf16>, vector<8x32xf32> -> vector<8x32xf32>
    %c0_10 = arith.constant 0 : index
    %9 = memref.load %arg1[%c0_10] : memref<1xf32, #tpu.memory_space<smem>>
    %cst_11 = arith.constant 0.000000e+00 : f32
    %10 = vector.broadcast %cst_11 : f32 to vector<8x32xf32>
    %11 = arith.cmpf ogt, %8, %10 : vector<8x32xf32>
    %12 = vector.broadcast %9 : f32 to vector<8x32xf32>
    %13 = arith.mulf %12, %8 : vector<8x32xf32>
    %14 = arith.select %11, %8, %13 : vector<8x32xi1>, vector<8x32xf32>
    %15 = arith.truncf %14 : vector<8x32xf32> to vector<8x32xbf16>
    %cst_12 = arith.constant dense<0.000000e+00> : vector<8x32xf32>
    %16 = tpu.matmul %1, %15, %cst_12 {dimension_numbers = #tpu.dot_dimension_numbers<[1], [0], [0], [1], [0, 0, 1, 1], [], []>} : vector<8x8xbf16>, vector<8x32xbf16>, vector<8x32xf32> -> vector<8x32xf32>
    %17 = arith.truncf %16 : vector<8x32xf32> to vector<8x32xbf16>
    %cst_13 = arith.constant dense<0.000000e+00> : vector<8x128xf32>
    %18 = tpu.matmul %17, %5, %cst_13 {dimension_numbers = #tpu.dot_dimension_numbers<[1], [0], [0], [1], [0, 0, 1, 1], [], []>} : vector<8x32xbf16>, vector<32x128xbf16>, vector<8x128xf32> -> vector<8x128xf32>
    %c0_14 = arith.constant 0 : index
    %c0_15 = arith.constant 0 : index
    %c0_16 = arith.constant 0 : index
    %19 = vector.load %arg6[%c0_14, %c0_15, %c0_16] : memref<1x8x128xf32, #tpu.memory_space<vmem>>, vector<1x8x128xf32>
    %20 = vector.shape_cast %19 : vector<1x8x128xf32> to vector<8x128xf32>
    %21 = vector.shape_cast %18 : vector<8x128xf32> to vector<1x8x128xf32>
    tpu.vector_store %arg6[%c0_14, %c0_15, %c0_16], %21 {strides = array<i32>} : memref<1x8x128xf32, #tpu.memory_space<vmem>>, vector<1x8x128xf32>,
    return
  }
  func.func @transform_0(%arg0: i32) -> i32 {
    %c0_i32 = arith.constant 0 : i32
    %c0_i32_0 = arith.constant 0 : i32
    return %c0_i32 : i32
  }
  func.func @transform_1(%arg0: i32) -> (i32, i32, i32) {
    %c0_i32 = arith.constant 0 : i32
    %c0_i32_0 = arith.constant 0 : i32
    %c0_i32_1 = arith.constant 0 : i32
    return %arg0, %c0_i32, %c0_i32_0 : i32, i32, i32
  }
  func.func @transform_2(%arg0: i32) -> (i32, i32, i32) {
    %c0_i32 = arith.constant 0 : i32
    %c0_i32_0 = arith.constant 0 : i32
    %c0_i32_1 = arith.constant 0 : i32
    return %arg0, %c0_i32, %c0_i32_0 : i32, i32, i32
  }
  func.func @transform_3(%arg0: i32) -> (i32, i32) {
    %c0_i32 = arith.constant 0 : i32
    %c0_i32_0 = arith.constant 0 : i32
    %c0_i32_1 = arith.constant 0 : i32
    return %c0_i32, %c0_i32_0 : i32, i32
  }
  func.func @transform_4(%arg0: i32) -> (i32, i32) {
    %c0_i32 = arith.constant 0 : i32
    %c0_i32_0 = arith.constant 0 : i32
    %c0_i32_1 = arith.constant 0 : i32
    return %c0_i32, %c0_i32_0 : i32, i32
  }
  func.func @transform_5(%arg0: i32) -> (i32, i32, i32) {
    %c0_i32 = arith.constant 0 : i32
    %c0_i32_0 = arith.constant 0 : i32
    %c0_i32_1 = arith.constant 0 : i32
    return %arg0, %c0_i32, %c0_i32_0 : i32, i32, i32
  }
}

</mosaic_0001>

<llo_original>
// kernel: tpu_custom_call.1
$region0: #{tpu_custom_call.1}
  #allocation0 [shape = 'u32[]', space=smem, size = 0x4, offset = 0x4, fixed_abs, tag = 'smem constant byte address 0x4 - core index']
  #allocation1 [shape = 'u32[144,128]{1,0:T(1,128)}', space=vmem, size = 0x12000, scoped, tag = 'internal scratch']
  #allocation2 [shape = 'f32[1]{0:T(128)S(6)}', space=smem, size = 0x200, scoped, tag = 'scoped memory for tpu_custom_call.1']
  %s0 = inlined_call_operand.<no memory space> [shape: f32[1], index: 0, kind: input, shape index: {}]
  %s1 = inlined_call_operand.hbm [shape: bf16[4,8,8], index: 1, kind: input, shape index: {}]
  %s2 = inlined_call_operand.hbm [shape: bf16[4,8,16], index: 2, kind: input, shape index: {}]
  %s3 = inlined_call_operand.vmem [shape: bf16[16,32], index: 3, kind: input, shape index: {}]
  %s4 = inlined_call_operand.hbm [shape: bf16[32,128], index: 4, kind: input, shape index: {}]
  %s5 = inlined_call_operand.hbm [shape: f32[4,8,128], index: 5, kind: output, shape index: {}]
  %s6 = sld [smem:[#allocation0]]
  $region65: #{tpu_custom_call.1} parent=0
    _
  %s8 = ssub.s32 1, %s6
  %s9 = scalar_select 0, %s8, %s6
  %10 = sst [smem:[#allocation2]] %s0
  $region1: #{tpu_custom_call.1} parent=0
    #allocation3 [shape = 'u8[4096]{0}', space=vmem, size = 0x1000, scoped, tag = 'input window, operand 1']
    #allocation4 [shape = 's32[2]{0}', space=sflag, size = 0x8, scoped, tag = 'scoped memory for tpu_custom_call.1']
    #allocation5 [shape = 's32[2]{0}', space=sflag, size = 0x8, scoped, tag = 'scoped memory for tpu_custom_call.1']
    #allocation6 [shape = 'u8[4096]{0}', space=vmem, size = 0x1000, scoped, tag = 'input window, operand 2']
    #allocation7 [shape = 's32[2]{0}', space=sflag, size = 0x8, scoped, tag = 'scoped memory for tpu_custom_call.1']
    #allocation8 [shape = 'u8[8192]{0}', space=vmem, size = 0x2000, scoped, tag = 'input window, operand 4, single buffered']
    #allocation9 [shape = 'u8[8192]{0}', space=vmem, size = 0x2000, scoped, tag = 'output window, operand 0']
    %11 = vsyncpa [#allocation4], 0
    %s12 = scalar_lea.sflag [#allocation4], 1
    %13 = vsyncpa %s12, 0
    %14 = vsyncpa [#allocation7], 0
    %s15 = scalar_lea.sflag [#allocation7], 1
    %16 = vsyncpa %s15, 0
    %17 = vsyncpa [#allocation5], 0
    %s18 = scalar_lea.sflag [#allocation5], 1
    %19 = vsyncpa %s18, 0
    loop: start=0, step=1, limit=6
    $region2: #{tpu_custom_call.1} parent=1 // loop_pre_header
      _
    $region3: #{tpu_custom_call.1} parent=1 // loop_header
      %s21 = sphi 0, %s25
      %p22 = scmp.ge.s32.totalorder %s21, 6
      %s29 = sphi 0, %s29
      %s31 = sphi 0, %s29
      %s32 = sphi 0, %s31
      %s46 = sphi 0, %s32
      %s52 = sphi 0, %s54
      %s55 = sphi 0, %s52
      %s56 = sphi 0, %s55
      %s72 = sphi 0, %s56
      %s78 = sphi 0, %s80
      %s81 = sphi 0, %s78
      %s82 = sphi 0, %s81
      %s98 = sphi 0, %s82
      %s102 = sphi 0, %s102
      %s104 = sphi 0, %s102
      %s105 = sphi 0, %s104
      %s119 = sphi 0, %s105
      %s123 = sphi 0, %s123
      %s125 = sphi 0, %s123
      %s126 = sphi 0, %s125
      %s140 = sphi 0, %s126
      %s146 = sphi 0, %s148
      %s149 = sphi 0, %s146
      %s150 = sphi 0, %s149
      %s166 = sphi 0, %s150
    $region4: #{tpu_custom_call.1} parent=1 // loop_header_branch
      %24 = sbr.rel (%p22) target = $region8
    $region5: #{tpu_custom_call.1} parent=1 // loop_body
      %s26 = ssub.s32 %s21, 1
      %s27 = ssub.s32 %s21, 2
      %s28 = sadd.s32 %s21, 1
      %s30 = sadd.s32 %s29, 1
      %p33 = scmp.eq.s32.totalorder %s21, 3
      %p34 = scmp.ne.s32.totalorder %s29, %s31
      %p35 = scmp.eq.s32.totalorder %s21, 0
      %p36 = por %p34, %p35
      %p37 = scmp.ne.s32.totalorder %s29, %s31
      %p38 = scmp.eq.s32.totalorder %s26, 3
      %p39 = por %p37, %p38
      %p40 = scmp.ne.s32.totalorder %s31, %s32
      %p41 = scmp.eq.s32.totalorder %s26, 0
      %p42 = por %p40, %p41
      %p43 = scmp.ne.s32.totalorder %s31, %s32
      %p44 = scmp.eq.s32.totalorder %s27, 3
      %p45 = por %p43, %p44
      %p47 = scmp.ne.s32.totalorder %s32, %s46
      %p48 = scmp.eq.s32.totalorder %s27, 0
      %p49 = por %p47, %p48
      %s50 = ssub.s32 %s21, %s28
      %p51 = scmp.eq.s32.totalorder %s50, 0
      %s53 = sadd.s32 %s52, 1
      %s54 = scalar_select %p51, %s52, %s53
      %p57 = pneg %p51
      %p58 = scmp.eq.s32.totalorder %s21, 3
      %p59 = por %p57, %p58
      %p60 = scmp.ne.s32.totalorder %s52, %s55
      %p61 = scmp.eq.s32.totalorder %s21, 0
      %p62 = por %p60, %p61
      %p63 = scmp.ne.s32.totalorder %s52, %s55
      %p64 = scmp.eq.s32.totalorder %s26, 3
      %p65 = por %p63, %p64
      %p66 = scmp.ne.s32.totalorder %s55, %s56
      %p67 = scmp.eq.s32.totalorder %s26, 0
      %p68 = por %p66, %p67
      %p69 = scmp.ne.s32.totalorder %s55, %s56
      %p70 = scmp.eq.s32.totalorder %s27, 3
      %p71 = por %p69, %p70
      %p73 = scmp.ne.s32.totalorder %s56, %s72
      %p74 = scmp.eq.s32.totalorder %s27, 0
      %p75 = por %p73, %p74
      %s76 = ssub.s32 %s21, %s28
      %p77 = scmp.eq.s32.totalorder %s76, 0
      %s79 = sadd.s32 %s78, 1
      %s80 = scalar_select %p77, %s78, %s79
      %p83 = pneg %p77
      %p84 = scmp.eq.s32.totalorder %s21, 3
      %p85 = por %p83, %p84
      %p86 = scmp.ne.s32.totalorder %s78, %s81
      %p87 = scmp.eq.s32.totalorder %s21, 0
      %p88 = por %p86, %p87
      %p89 = scmp.ne.s32.totalorder %s78, %s81
      %p90 = scmp.eq.s32.totalorder %s26, 3
      %p91 = por %p89, %p90
      %p92 = scmp.ne.s32.totalorder %s81, %s82
      %p93 = scmp.eq.s32.totalorder %s26, 0
      %p94 = por %p92, %p93
      %p95 = scmp.ne.s32.totalorder %s81, %s82
      %p96 = scmp.eq.s32.totalorder %s27, 3
      %p97 = por %p95, %p96
      %p99 = scmp.ne.s32.totalorder %s82, %s98
      %p100 = scmp.eq.s32.totalorder %s27, 0
      %p101 = por %p99, %p100
      %s103 = sadd.s32 %s102, 1
      %p106 = scmp.eq.s32.totalorder %s21, 3
      %p107 = scmp.ne.s32.totalorder %s102, %s104
      %p108 = scmp.eq.s32.totalorder %s21, 0
      %p109 = por %p107, %p108
      %p110 = scmp.ne.s32.totalorder %s102, %s104
      %p111 = scmp.eq.s32.totalorder %s26, 3
      %p112 = por %p110, %p111
      %p113 = scmp.ne.s32.totalorder %s104, %s105
      %p114 = scmp.eq.s32.totalorder %s26, 0
      %p115 = por %p113, %p114
      %p116 = scmp.ne.s32.totalorder %s104, %s105
      %p117 = scmp.eq.s32.totalorder %s27, 3
      %p118 = por %p116, %p117
      %p120 = scmp.ne.s32.totalorder %s105, %s119
      %p121 = scmp.eq.s32.totalorder %s27, 0
      %p122 = por %p120, %p121
      %s124 = sadd.s32 %s123, 1
      %p127 = scmp.eq.s32.totalorder %s21, 3
      %p128 = scmp.ne.s32.totalorder %s123, %s125
      %p129 = scmp.eq.s32.totalorder %s21, 0
      %p130 = por %p128, %p129
      %p131 = scmp.ne.s32.totalorder %s123, %s125
      %p132 = scmp.eq.s32.totalorder %s26, 3
      %p133 = por %p131, %p132
      %p134 = scmp.ne.s32.totalorder %s125, %s126
      %p135 = scmp.eq.s32.totalorder %s26, 0
      %p136 = por %p134, %p135
      %p137 = scmp.ne.s32.totalorder %s125, %s126
      %p138 = scmp.eq.s32.totalorder %s27, 3
      %p139 = por %p137, %p138
      %p141 = scmp.ne.s32.totalorder %s126, %s140
      %p142 = scmp.eq.s32.totalorder %s27, 0
      %p143 = por %p141, %p142
      %s144 = ssub.s32 %s21, %s28
      %p145 = scmp.eq.s32.totalorder %s144, 0
      %s147 = sadd.s32 %s146, 1
      %s148 = scalar_select %p145, %s146, %s147
      %p151 = pneg %p145
      %p152 = scmp.eq.s32.totalorder %s21, 3
      %p153 = por %p151, %p152
      %p154 = scmp.ne.s32.totalorder %s146, %s149
      %p155 = scmp.eq.s32.totalorder %s21, 0
      %p156 = por %p154, %p155
      %p157 = scmp.ne.s32.totalorder %s146, %s149
      %p158 = scmp.eq.s32.totalorder %s26, 3
      %p159 = por %p157, %p158
      %p160 = scmp.ne.s32.totalorder %s149, %s150
      %p161 = scmp.eq.s32.totalorder %s26, 0
      %p162 = por %p160, %p161
      %p163 = scmp.ne.s32.totalorder %s149, %s150
      %p164 = scmp.eq.s32.totalorder %s27, 3
      %p165 = por %p163, %p164
      %p167 = scmp.ne.s32.totalorder %s150, %s166
      %p168 = scmp.eq.s32.totalorder %s27, 0
      %p169 = por %p167, %p168
      %p170 = scmp.le.s32.totalorder 1, %s21
      %p171 = scmp.lt.s32.totalorder %s21, 5
      %p172 = pnand %p170, %p171
      %p173 = pneg %p172
      // Predicated region
      $region9: #{tpu_custom_call.1} parent=5 // pred_check
        _
      $region10: #{tpu_custom_call.1} parent=5 // pred_check_branch
        %175 = sbr.rel (%p172) target = $region12
      $region11: #{tpu_custom_call.1} parent=5 // pred_region
        %s176 = ssub.s32 %s21, 1
        // Predicated region
        $region13: #{tpu_custom_call.1} parent=11 // pred_check
          %p177 = pneg %p42
        $region14: #{tpu_custom_call.1} parent=11 // pred_check_branch
          %179 = sbr.rel (%p177) target = $region16
        $region15: #{tpu_custom_call.1} parent=11 // pred_region
          _
        $region16: #{tpu_custom_call.1} parent=11 // pred_fallthru
          _
        // Predicated region
        $region17: #{tpu_custom_call.1} parent=11 // pred_check
          %p180 = pneg %p115
        $region18: #{tpu_custom_call.1} parent=11 // pred_check_branch
          %182 = sbr.rel (%p180) target = $region20
        $region19: #{tpu_custom_call.1} parent=11 // pred_region
          _
        $region20: #{tpu_custom_call.1} parent=11 // pred_fallthru
          _
        // Predicated region
        $region21: #{tpu_custom_call.1} parent=11 // pred_check
          %p183 = pneg %p136
        $region22: #{tpu_custom_call.1} parent=11 // pred_check_branch
          %185 = sbr.rel (%p183) target = $region24
        $region23: #{tpu_custom_call.1} parent=11 // pred_region
          %s187 = ssub.s32 256, 256
          %188 = vsyncadd [#allocation7], %s187
          %s189 = sshll.u32 [#allocation8], 4
          %s190 = int_to_ptr.vmem [resolvable:$true] %s189
          %195 = dma.hbm_to_vmem [thread:$0]  %s4, 256, %s190, [#allocation7], 64, 64, 4
        $region24: #{tpu_custom_call.1} parent=11 // pred_fallthru
          _
      $region12: #{tpu_custom_call.1} parent=5 // pred_fallthru
        _
      %p196 = scmp.lt.s32.totalorder %s21, 4
      // Predicated region
      $region25: #{tpu_custom_call.1} parent=5 // pred_check
        %p197 = pneg %p196
      $region26: #{tpu_custom_call.1} parent=5 // pred_check_branch
        %199 = sbr.rel (%p197) target = $region28
      $region27: #{tpu_custom_call.1} parent=5 // pred_region
        // Predicated region
        $region29: #{tpu_custom_call.1} parent=27 // pred_check
          %p200 = pneg %p62
        $region30: #{tpu_custom_call.1} parent=27 // pred_check_branch
          %202 = sbr.rel (%p200) target = $region32
        $region31: #{tpu_custom_call.1} parent=27 // pred_region
          %s203 = sand.u32 %s52, 1
          %s204 = scalar_lea.sflag [#allocation4], %s203
          %s205 = sand.u32 %s52, 1
          %s206 = smul.addr %s205, 4
          %s207 = scalar_lea.vmem [#allocation3], %s206
          %s209 = ssub.s32 64, 64
          %210 = vsyncadd %s204, %s209
          %s211 = smul.addr %s21, 64
          %s212 = scalar_lea.hbm %s1, %s211
          %s214 = sshll.u32 %s207, 4
          %s215 = int_to_ptr.vmem [resolvable:$true] %s214
          %217 = dma.hbm_to_vmem [thread:$0]  %s212, 64, %s215, %s204
        $region32: #{tpu_custom_call.1} parent=27 // pred_fallthru
          _
        // Predicated region
        $region33: #{tpu_custom_call.1} parent=27 // pred_check
          %p218 = pneg %p88
        $region34: #{tpu_custom_call.1} parent=27 // pred_check_branch
          %220 = sbr.rel (%p218) target = $region36
        $region35: #{tpu_custom_call.1} parent=27 // pred_region
          %s221 = sand.u32 %s21, 1
          %s222 = scalar_lea.sflag [#allocation7], %s221
          %s223 = sand.u32 %s78, 1
          %s224 = smul.addr %s223, 4
          %s225 = scalar_lea.vmem [#allocation6], %s224
          %s227 = ssub.s32 64, 64
          %228 = vsyncadd %s222, %s227
          %s229 = smul.addr %s21, 64
          %s230 = scalar_lea.hbm %s2, %s229
          %s232 = sshll.u32 %s225, 4
          %s233 = int_to_ptr.vmem [resolvable:$true] %s232
          %235 = dma.hbm_to_vmem [thread:$0]  %s230, 64, %s233, %s222
        $region36: #{tpu_custom_call.1} parent=27 // pred_fallthru
          _
      $region28: #{tpu_custom_call.1} parent=5 // pred_fallthru
        _
      %p236 = scmp.le.s32.totalorder 1, %s21
      %p237 = scmp.lt.s32.totalorder %s21, 5
      %p238 = pnand %p236, %p237
      %p239 = pneg %p238
      // Predicated region
      $region37: #{tpu_custom_call.1} parent=5 // pred_check
        _
      $region38: #{tpu_custom_call.1} parent=5 // pred_check_branch
        %241 = sbr.rel (%p238) target = $region40
      $region39: #{tpu_custom_call.1} parent=5 // pred_region
        %s242 = ssub.s32 %s21, 1
        %s243 = sand.u32 %s55, 1
        %s244 = scalar_lea.sflag [#allocation4], %s243
        %s245 = sand.u32 %s55, 1
        %s246 = smul.addr %s245, 4
        %s247 = scalar_lea.vmem [#allocation3], %s246
        // Predicated region
        $region41: #{tpu_custom_call.1} parent=39 // pred_check
          %p248 = pneg %p68
        $region42: #{tpu_custom_call.1} parent=39 // pred_check_branch
          %250 = sbr.rel (%p248) target = $region44
        $region43: #{tpu_custom_call.1} parent=39 // pred_region
          %251 = dma.done %s244, 64
        $region44: #{tpu_custom_call.1} parent=39 // pred_fallthru
          _
        %s252 = sand.u32 %s26, 1
        %s253 = scalar_lea.sflag [#allocation7], %s252
        %s254 = sand.u32 %s81, 1
        %s255 = smul.addr %s254, 4
        %s256 = scalar_lea.vmem [#allocation6], %s255
        // Predicated region
        $region45: #{tpu_custom_call.1} parent=39 // pred_check
          %p257 = pneg %p94
        $region46: #{tpu_custom_call.1} parent=39 // pred_check_branch
          %259 = sbr.rel (%p257) target = $region48
        $region47: #{tpu_custom_call.1} parent=39 // pred_region
          %260 = dma.done %s253, 64
        $region48: #{tpu_custom_call.1} parent=39 // pred_fallthru
          _
        // Predicated region
        $region49: #{tpu_custom_call.1} parent=39 // pred_check
          %p261 = pneg %p136
        $region50: #{tpu_custom_call.1} parent=39 // pred_check_branch
          %263 = sbr.rel (%p261) target = $region52
        $region51: #{tpu_custom_call.1} parent=39 // pred_region
          %264 = dma.done [#allocation7], 256
        $region52: #{tpu_custom_call.1} parent=39 // pred_fallthru
          _
        %p265 = pneg %p42
        %p266 = pneg %p39
        %s267 = sand.u32 %s55, 1
        %s268 = scalar_lea.sflag [#allocation4], %s267
        %s269 = sand.u32 %s55, 1
        %s270 = smul.addr %s269, 4
        %s271 = scalar_lea.vmem [#allocation3], %s270
        %p272 = pneg %p68
        %p273 = pneg %p65
        %s274 = sand.u32 %s26, 1
        %s275 = scalar_lea.sflag [#allocation7], %s274
        %s276 = sand.u32 %s81, 1
        %s277 = smul.addr %s276, 4
        %s278 = scalar_lea.vmem [#allocation6], %s277
        %p279 = pneg %p94
        %p280 = pneg %p91
        %p281 = pneg %p115
        %p282 = pneg %p112
        %p283 = pneg %p136
        %p284 = pneg %p133
        %p285 = pneg %p162
        %p286 = pneg %p159
        %s287 = sand.u32 %s149, 1
        %s288 = scalar_lea.sflag [#allocation5], %s287
        %s289 = sand.u32 %s149, 1
        %s290 = smul.addr %s289, 8
        %s291 = scalar_lea.vmem [#allocation9], %s290
        %v293 = vld [vmem:[%s247] sm:$0xf]
        %v294 = vld [vmem:[%s256] sm:$0xf]
        %v295 = vld [vmem:[%s3] sm:$0xf]
        %v296 = vld [vmem:[%s3 + $0x4] sm:$0xf]
        %v297 = vld [vmem:[#allocation8] sm:$0xf]
        %v298 = vld [vmem:[#allocation8 + $0x4] sm:$0xf]
        %v299 = vld [vmem:[#allocation8 + $0x8] sm:$0xf]
        %v300 = vld [vmem:[#allocation8 + $0xc] sm:$0xf]
        %vm301 = vcmask 64512
        %v303 = vsel %vm301, %v293, 0
        %vm305 = vcmask 1043456
        %v307 = vsel %vm305, %v294, 0
        %309 = vmatprep.subr.bf16.mxu0 0
        %310 = vmatpush1.bf16.msra.mxu0 %v307
        %311 = vmatprep.subr.bf16.mxu0 0
        %312 = vmatpush1.bf16.msra.mxu0 0
        %313 = vmatprep.subr.bf16.mxu0 0
        %314 = vmatpush1.bf16.msra.mxu0 0
        %315 = vmatprep.subr.bf16.mxu0 0
        %316 = vmatpush1.bf16.msra.mxu0 0
        %317 = vmatprep.subr.bf16.mxu0 0
        %318 = vmatpush1.bf16.msra.mxu0 0
        %319 = vmatprep.subr.bf16.mxu0 0
        %320 = vmatpush1.bf16.msra.mxu0 0
        %321 = vmatprep.subr.bf16.mxu0 0
        %322 = vmatpush1.bf16.msra.mxu0 0
        %323 = vmatprep.subr.bf16.mxu0 0
        %324 = vmatpush1.bf16.msra.mxu0 0
        %325 = vmatprep.subr.bf16.mxu0 0
        %326 = vmatpush1.bf16.msra.mxu0 0
        %327 = vmatprep.subr.bf16.mxu0 0
        %328 = vmatpush1.bf16.msra.mxu0 0
        %329 = vmatprep.subr.bf16.mxu0 0
        %330 = vmatpush1.bf16.msra.mxu0 0
        %331 = vmatprep.subr.bf16.mxu0 0
        %332 = vmatpush1.bf16.msra.mxu0 0
        %333 = vmatprep.subr.bf16.mxu0 0
        %334 = vmatpush1.bf16.msra.mxu0 0
        %335 = vmatprep.subr.bf16.mxu0 0
        %336 = vmatpush1.bf16.msra.mxu0 0
        %337 = vmatprep.subr.bf16.mxu0 0
        %338 = vmatpush1.bf16.msra.mxu0 0
        %339 = vmatprep.subr.bf16.mxu0 0
        %340 = vmatpush1.bf16.msra.mxu0 0
        %341 = vmatprep.mubr.bf16.mxu0 0
        %342 = vmatmul.mubr.bf16.gmra.mrb[0].mxu0 %v303
        %v343 = vpop.f32.mrb[0].mxu0
        %v344 = vadd.f32 0.0, %v343
        %v345 = vpop.f32.mrb[0].mxu0
        %v346 = vpop.f32.mrb[0].mxu0
        %v347 = vpop.f32.mrb[0].mxu0
        %348 = vdwg.mxu0
        %v349 = vpack.c.bf16 %v344, %v344
        %v352 = vunpack.c.l.b16 %v295
        %v353 = vunpack.c.l.b16 %v296
        %v354 = vpack.c.b16 %v353, %v352
        %vm356 = vcmask 130048
        %v358 = vsel %vm356, %v349, 0
        %360 = vmatprep.subr.bf16.mxu0 0
        %361 = vmatpush1.bf16.msra.mxu0 %v354
        %362 = vmatprep.subr.bf16.mxu0 0
        %363 = vmatpush1.bf16.msra.mxu0 0
        %364 = vmatprep.subr.bf16.mxu0 0
        %365 = vmatpush1.bf16.msra.mxu0 0
        %366 = vmatprep.subr.bf16.mxu0 0
        %367 = vmatpush1.bf16.msra.mxu0 0
        %368 = vmatprep.subr.bf16.mxu0 0
        %369 = vmatpush1.bf16.msra.mxu0 0
        %370 = vmatprep.subr.bf16.mxu0 0
        %371 = vmatpush1.bf16.msra.mxu0 0
        %372 = vmatprep.subr.bf16.mxu0 0
        %373 = vmatpush1.bf16.msra.mxu0 0
        %374 = vmatprep.subr.bf16.mxu0 0
        %375 = vmatpush1.bf16.msra.mxu0 0
        %376 = vmatprep.subr.bf16.mxu0 0
        %377 = vmatpush1.bf16.msra.mxu0 0
        %378 = vmatprep.subr.bf16.mxu0 0
        %379 = vmatpush1.bf16.msra.mxu0 0
        %380 = vmatprep.subr.bf16.mxu0 0
        %381 = vmatpush1.bf16.msra.mxu0 0
        %382 = vmatprep.subr.bf16.mxu0 0
        %383 = vmatpush1.bf16.msra.mxu0 0
        %384 = vmatprep.subr.bf16.mxu0 0
        %385 = vmatpush1.bf16.msra.mxu0 0
        %386 = vmatprep.subr.bf16.mxu0 0
        %387 = vmatpush1.bf16.msra.mxu0 0
        %388 = vmatprep.subr.bf16.mxu0 0
        %389 = vmatpush1.bf16.msra.mxu0 0
        %390 = vmatprep.subr.bf16.mxu0 0
        %391 = vmatpush1.bf16.msra.mxu0 0
        %392 = vmatprep.mubr.bf16.mxu0 0
        %393 = vmatmul.mubr.bf16.gmra.mrb[0].mxu0 %v358
        %v394 = vpop.f32.mrb[0].mxu0
        %v395 = vadd.f32 0.0, %v394
        %v396 = vpop.f32.mrb[0].mxu0
        %v397 = vpop.f32.mrb[0].mxu0
        %v398 = vpop.f32.mrb[0].mxu0
        %399 = vdwg.mxu0
        %s400 = sld [smem:[#allocation2]]
        %vm401 = vcmp.gt.f32.partialorder %v395, 0.0
        %v402 = vstv %s400
        %v403 = vmul.f32 %v402, %v395
        %v404 = vsel %vm401, %v395, %v403
        %v405 = vpack.c.bf16 %v404, %v404
        %v407 = vsel %vm305, %v405, 0
        %409 = vmatprep.subr.bf16.mxu0 0
        %410 = vmatpush1.bf16.msra.mxu0 %v407
        %411 = vmatprep.subr.bf16.mxu0 0
        %412 = vmatpush1.bf16.msra.mxu0 0
        %413 = vmatprep.subr.bf16.mxu0 0
        %414 = vmatpush1.bf16.msra.mxu0 0
        %415 = vmatprep.subr.bf16.mxu0 0
        %416 = vmatpush1.bf16.msra.mxu0 0
        %417 = vmatprep.subr.bf16.mxu0 0
        %418 = vmatpush1.bf16.msra.mxu0 0
        %419 = vmatprep.subr.bf16.mxu0 0
        %420 = vmatpush1.bf16.msra.mxu0 0
        %421 = vmatprep.subr.bf16.mxu0 0
        %422 = vmatpush1.bf16.msra.mxu0 0
        %423 = vmatprep.subr.bf16.mxu0 0
        %424 = vmatpush1.bf16.msra.mxu0 0
        %425 = vmatprep.subr.bf16.mxu0 0
        %426 = vmatpush1.bf16.msra.mxu0 0
        %427 = vmatprep.subr.bf16.mxu0 0
        %428 = vmatpush1.bf16.msra.mxu0 0
        %429 = vmatprep.subr.bf16.mxu0 0
        %430 = vmatpush1.bf16.msra.mxu0 0
        %431 = vmatprep.subr.bf16.mxu0 0
        %432 = vmatpush1.bf16.msra.mxu0 0
        %433 = vmatprep.subr.bf16.mxu0 0
        %434 = vmatpush1.bf16.msra.mxu0 0
        %435 = vmatprep.subr.bf16.mxu0 0
        %436 = vmatpush1.bf16.msra.mxu0 0
        %437 = vmatprep.subr.bf16.mxu0 0
        %438 = vmatpush1.bf16.msra.mxu0 0
        %439 = vmatprep.subr.bf16.mxu0 0
        %440 = vmatpush1.bf16.msra.mxu0 0
        %441 = vmatprep.mubr.bf16.mxu0 0
        %442 = vmatmul.mubr.bf16.gmra.mrb[0].mxu0 %v303
        %v443 = vpop.f32.mrb[0].mxu0
        %v444 = vadd.f32 0.0, %v443
        %v445 = vpop.f32.mrb[0].mxu0
        %v446 = vpop.f32.mrb[0].mxu0
        %v447 = vpop.f32.mrb[0].mxu0
        %448 = vdwg.mxu0
        %v449 = vpack.c.bf16 %v444, %v444
        %v454 = vunpack.c.l.b16 %v297
        %v455 = vunpack.c.l.b16 %v298
        %v456 = vunpack.c.l.b16 %v299
        %v457 = vunpack.c.l.b16 %v300
        %v458 = vpack.c.b16 %v455, %v454
        %v459 = vpack.c.b16 %v457, %v456
        %vm462 = vcmask 261120
        %v464 = vsel %vm462, %v449, 0
        %466 = vmatprep.subr.bf16.mxu0 0
        %467 = vmatpush1.bf16.msra.mxu0 %v458
        %468 = vmatprep.subr.bf16.mxu0 0
        %469 = vmatpush1.bf16.msra.mxu0 %v459
        %470 = vmatprep.subr.bf16.mxu0 0
        %471 = vmatpush1.bf16.msra.mxu0 0
        %472 = vmatprep.subr.bf16.mxu0 0
        %473 = vmatpush1.bf16.msra.mxu0 0
        %474 = vmatprep.subr.bf16.mxu0 0
        %475 = vmatpush1.bf16.msra.mxu0 0
        %476 = vmatprep.subr.bf16.mxu0 0
        %477 = vmatpush1.bf16.msra.mxu0 0
        %478 = vmatprep.subr.bf16.mxu0 0
        %479 = vmatpush1.bf16.msra.mxu0 0
        %480 = vmatprep.subr.bf16.mxu0 0
        %481 = vmatpush1.bf16.msra.mxu0 0
        %482 = vmatprep.subr.bf16.mxu0 0
        %483 = vmatpush1.bf16.msra.mxu0 0
        %484 = vmatprep.subr.bf16.mxu0 0
        %485 = vmatpush1.bf16.msra.mxu0 0
        %486 = vmatprep.subr.bf16.mxu0 0
        %487 = vmatpush1.bf16.msra.mxu0 0
        %488 = vmatprep.subr.bf16.mxu0 0
        %489 = vmatpush1.bf16.msra.mxu0 0
        %490 = vmatprep.subr.bf16.mxu0 0
        %491 = vmatpush1.bf16.msra.mxu0 0
        %492 = vmatprep.subr.bf16.mxu0 0
        %493 = vmatpush1.bf16.msra.mxu0 0
        %494 = vmatprep.subr.bf16.mxu0 0
        %495 = vmatpush1.bf16.msra.mxu0 0
        %496 = vmatprep.subr.bf16.mxu0 0
        %497 = vmatpush1.bf16.msra.mxu0 0
        %498 = vmatprep.mubr.bf16.mxu0 0
        %499 = vmatmul.mubr.bf16.gmra.mrb[0].mxu0 %v464
        %v500 = vpop.f32.mrb[0].mxu0
        %v501 = vadd.f32 0.0, %v500
        %v502 = vpop.f32.mrb[0].mxu0
        %v503 = vpop.f32.mrb[0].mxu0
        %v504 = vpop.f32.mrb[0].mxu0
        %505 = vdwg.mxu0
        %506 = vst [vmem:[%s291] sm:$0xff] %v501
        %s507 = sand.u32 %s149, 1
        %s508 = scalar_lea.sflag [#allocation5], %s507
        %s509 = sand.u32 %s149, 1
        %s510 = smul.addr %s509, 8
        %s511 = scalar_lea.vmem [#allocation9], %s510
        // Predicated region
        $region53: #{tpu_custom_call.1} parent=39 // pred_check
          %p512 = pneg %p159
        $region54: #{tpu_custom_call.1} parent=39 // pred_check_branch
          %514 = sbr.rel (%p512) target = $region56
        $region55: #{tpu_custom_call.1} parent=39 // pred_region
          %s516 = ssub.s32 128, 128
          %517 = vsyncadd %s508, %s516
          %s518 = smul.addr %s26, 128
          %s519 = scalar_lea.hbm %s5, %s518
          %s521 = sshll.u32 %s511, 4
          %s522 = int_to_ptr.vmem [resolvable:$true] %s521
          %524 = dma.vmem_to_hbm [thread:$0]  %s522, 128, %s519, %s508
        $region56: #{tpu_custom_call.1} parent=39 // pred_fallthru
          _
      $region40: #{tpu_custom_call.1} parent=5 // pred_fallthru
        _
      %p525 = scmp.le.s32.totalorder 2, %s21
      // Predicated region
      $region57: #{tpu_custom_call.1} parent=5 // pred_check
        %p526 = pneg %p525
      $region58: #{tpu_custom_call.1} parent=5 // pred_check_branch
        %528 = sbr.rel (%p526) target = $region60
      $region59: #{tpu_custom_call.1} parent=5 // pred_region
        %s529 = ssub.s32 %s21, 2
        // Predicated region
        $region61: #{tpu_custom_call.1} parent=59 // pred_check
          %p530 = pneg %p165
        $region62: #{tpu_custom_call.1} parent=59 // pred_check_branch
          %532 = sbr.rel (%p530) target = $region64
        $region63: #{tpu_custom_call.1} parent=59 // pred_region
          %s533 = sand.u32 %s150, 1
          %s534 = scalar_lea.sflag [#allocation5], %s533
          %s535 = sand.u32 %s150, 1
          %s536 = smul.addr %s535, 8
          %s537 = scalar_lea.vmem [#allocation9], %s536
          %538 = dma.done %s534, 128
        $region64: #{tpu_custom_call.1} parent=59 // pred_fallthru
          _
      $region60: #{tpu_custom_call.1} parent=5 // pred_fallthru
        _
    $region6: #{tpu_custom_call.1} parent=1 // loop_footer
      %s25 = sadd.s32 1, %s21
    $region7: #{tpu_custom_call.1} parent=1 // loop_footer_branch
      %20 = sbr.rel target = $region3
    $region8: #{tpu_custom_call.1} parent=1 // loop_exit
      _
    %539 = vsyncpa [#allocation4], 1
    %s540 = scalar_lea.sflag [#allocation4], 1
    %541 = vsyncpa %s540, 1
    %542 = vsyncpa [#allocation7], 1
    %s543 = scalar_lea.sflag [#allocation7], 1
    %544 = vsyncpa %s543, 1
    %545 = vsyncpa [#allocation5], 1
    %s546 = scalar_lea.sflag [#allocation5], 1
    %547 = vsyncpa %s546, 1

</llo_original>
